<compile_context>
chip_gen: v7x
topology: tpu7x:2x2x1
jax: 0.10.0
libtpu: 0.0.40
codegen_flags: <defaults>
</compile_context>

<pallas_src>
from functools import partial

import jax
import jax.numpy as jnp
from jax import lax
from jax.experimental import pallas as pl
from jax.experimental.pallas import tpu as pltpu

LN_EPS = 1e-5
_INV_SQRT2 = 0.7071067811865476


# ----------------------------- math helpers ---------------------------------

def _layernorm(x, gamma, beta):
    # two-pass (centered) statistics: numerically stable, matches nn.LayerNorm
    mu = jnp.mean(x, axis=-1, keepdims=True)
    c = x - mu
    var = jnp.mean(c * c, axis=-1, keepdims=True)
    return c * lax.rsqrt(var + LN_EPS) * gamma + beta


def _gelu(x, approx=False):
    if approx:
        # tanh approximation -> EUP slot (relieves VALU on v5e); numerics differ slightly.
        return jax.nn.gelu(x, approximate=True)
    # exact (erf) GELU, matching nn.GELU() default
    return 0.5 * x * (1.0 + lax.erf(x * _INV_SQRT2))


# ------------------------------- kernel --------------------------------------

def feature_processor_kernel(x_ref, w1_ref, watt_ref, vec_ref, o_ref, *, approx_gelu=False):
    # vec_ref rows: 0=b1 1=ln1_g 2=ln1_b 3=b_att 4=ln2_g 5=ln2_b (rows 6,7 = pad)
    vec = vec_ref[...]
    b1, g1, be1 = vec[0:1, :], vec[1:2, :], vec[2:3, :]
    b_att, g2, be2 = vec[3:4, :], vec[4:5, :], vec[5:6, :]

    # projector: Linear (bf16 MXU operands, f32 acc) -> LayerNorm -> GELU
    x = x_ref[...].astype(jnp.bfloat16)   # no-op if x already bf16
    h = jnp.dot(x, w1_ref[...], preferred_element_type=jnp.float32) + b1
    h = _gelu(_layernorm(h, g1, be1), approx=approx_gelu)

    # MHA with seq_len == 1 collapses to a single affine map (pre-fused Wv @ Wo).
    a = jnp.dot(h.astype(jnp.bfloat16), watt_ref[...],
                preferred_element_type=jnp.float32) + b_att

    # residual + post LayerNorm
    o_ref[...] = _layernorm(h + a, g2, be2).astype(o_ref.dtype)


# ---------------------------- wrapper helpers ---------------------------------

def _round_up(n, m):
    return (n + m - 1) // m * m


def _pack_params(params):
    """Fuse the attention path and lay the weights out for the kernel."""
    w1 = params["w1"].astype(jnp.bfloat16)                       # (Din, Dp) bf16
    w_att = (params["wv"] @ params["wo"]).astype(jnp.bfloat16)   # (Dp, Dp)  bf16
    b_att = params["bv"] @ params["wo"] + params["bo"]           # (1, Dp)   f32
    dp = w1.shape[1]
    rows = jnp.concatenate(
        [params["b1"], params["ln1_g"], params["ln1_b"],
         b_att, params["ln2_g"], params["ln2_b"],
         jnp.zeros((2, dp), jnp.float32)], axis=0)               # (8, Dp)
    return w1, w_att, rows


def _vmem_capacity_bytes():
    try:
        cap = getattr(pltpu.get_tpu_info(), "vmem_capacity_bytes", None)
        if isinstance(cap, int) and cap > 0:
            return cap
    except Exception:
        pass
    return 64 << 20  # conservative default (v7x); v5e/v6e actually have 128 MiB


def _tensorcores_per_chip():
    try:
        info = pltpu.get_tpu_info()
        for attr in ("num_cores", "num_tensorcores", "tensorcores_per_chip", "core_count"):
            v = getattr(info, attr, None)
            if isinstance(v, int) and v > 0:
                return v
    except Exception:
        pass
    try:
        if "v7" in jax.devices()[0].device_kind.lower():
            return 2
    except Exception:
        pass
    return 1


def _footprint_bytes(tb, din, dp, x_bytes, o_bytes):
    x_tile = 2 * tb * din * x_bytes      # double-buffered x tile
    o_tile = 2 * tb * dp * o_bytes       # double-buffered out tile
    w1 = din * dp * 2                    # bf16 W1, Buffered(1) -> single copy
    watt = dp * dp * 2                   # bf16 W_att, Buffered(1)
    vec = 8 * dp * 4                     # packed bias/LN rows, Buffered(1)
    interm = 8 * tb * dp * 4             # f32 temporaries (h, a, LN scratch)
    return int(1.25 * (x_tile + o_tile + w1 + watt + vec + interm)) + (1 << 20)


# -------------------------------- wrapper -------------------------------------

def feature_processor(x, params, *, tb=512, out_dtype=jnp.float32, approx_gelu=False):
    B, Din = x.shape
    Dp = params["w1"].shape[1]
    w1, w_att, vec = _pack_params(params)

    num_cores = _tensorcores_per_chip()
    usable_vmem = max(16 << 20, _vmem_capacity_bytes() - (8 << 20))
    x_bytes = jnp.dtype(x.dtype).itemsize
    o_bytes = jnp.dtype(out_dtype).itemsize

    # ---- batch tiling (generation aware, no padding of x) ----
    if B < 8:
        tb_eff = B                                 # block = full batch dim
    else:
        tb_eff = min(_round_up(tb, 8), (B // 8) * 8)
        b8 = _round_up(B, 8)
        # Multi-TensorCore chips (v7x): ensure >= num_cores grid steps so the
        # "parallel" grid axis can be sharded across cores.
        if num_cores > 1 and b8 >= 8 * num_cores:
            tb_eff = min(tb_eff, _round_up(pl.cdiv(b8, num_cores), 8))
        # Shrink until the resident footprint fits this chip's VMEM.
        while tb_eff > 8 and _footprint_bytes(tb_eff, Din, Dp, x_bytes, o_bytes) > usable_vmem:
            tb_eff = max(8, _round_up(tb_eff // 2, 8))
    n_steps = pl.cdiv(B, tb_eff)

    vmem_limit = min(
        max(16 << 20, _footprint_bytes(tb_eff, Din, Dp, x_bytes, o_bytes) + (2 << 20)),
        usable_vmem)

    # Constant-index weight blocks: single resident buffer (no double buffering).
    resident = lambda shape: pl.BlockSpec(shape, lambda i: (0, 0),
                                          pipeline_mode=pl.Buffered(1))

    out = pl.pallas_call(
        partial(feature_processor_kernel, approx_gelu=approx_gelu),
        out_shape=jax.ShapeDtypeStruct((B, Dp), out_dtype),
        grid_spec=pltpu.PrefetchScalarGridSpec(
            num_scalar_prefetch=0,
            grid=(n_steps,),
            in_specs=[
                pl.BlockSpec((tb_eff, Din), lambda i: (i, 0)),   # x batch tile
                resident((Din, Dp)),                             # W1 (bf16)
                resident((Dp, Dp)),                              # W_att = Wv@Wo (bf16)
                resident((8, Dp)),                               # packed bias/LN vectors
            ],
            out_specs=pl.BlockSpec((tb_eff, Dp), lambda i: (i, 0)),
        ),
        compiler_params=pltpu.CompilerParams(
            dimension_semantics=("parallel",),
            vmem_limit_bytes=vmem_limit,
        ),
    )(x, w1, w_att, vec)
    return out


# ------------------------------ references ------------------------------------

def feature_processor_ref(x, params):
    """Pure-f32, unfused reference (faithful to the PyTorch module in eval)."""
    h = x @ params["w1"] + params["b1"]
    h = _layernorm(h, params["ln1_g"], params["ln1_b"])
    h = _gelu(h)
    v = h @ params["wv"] + params["bv"]
    a = v @ params["wo"] + params["bo"]
    return _layernorm(h + a, params["ln2_g"], params["ln2_b"])


def feature_processor_matched_ref(x, params):
    """Reference applying the same bf16 casts / Wv@Wo fusion as the kernel."""
    w1, w_att, vec = _pack_params(params)
    h = jnp.dot(x.astype(jnp.bfloat16), w1,
                preferred_element_type=jnp.float32) + vec[0:1]
    h = _gelu(_layernorm(h, vec[1:2], vec[2:3]))
    a = jnp.dot(h.astype(jnp.bfloat16), w_att,
                preferred_element_type=jnp.float32) + vec[3:4]
    return _layernorm(h + a, vec[4:5], vec[5:6])


def make_params(key, input_dim, proj_dim):
    """Deterministic synthetic weights (shapes per the PyTorch module __init__)."""
    ks = jax.random.split(key, 6)
    s1 = 1.0 / jnp.sqrt(input_dim)
    s2 = 1.0 / jnp.sqrt(proj_dim)
    return {
        # nn.Linear(input_dim, proj_dim), stored transposed: (Din, Dp)
        "w1": jax.random.uniform(ks[0], (input_dim, proj_dim), jnp.float32, -s1, s1),
        "b1": jax.random.uniform(ks[1], (1, proj_dim), jnp.float32, -s1, s1),
        # nn.LayerNorm(proj_dim)
        "ln1_g": jnp.ones((1, proj_dim), jnp.float32),
        "ln1_b": jnp.zeros((1, proj_dim), jnp.float32),
        # MHA in_proj value slice (Dp, Dp) transposed, and out_proj (Dp, Dp) transposed
        "wv": jax.random.uniform(ks[2], (proj_dim, proj_dim), jnp.float32, -s2, s2),
        "bv": jax.random.uniform(ks[3], (1, proj_dim), jnp.float32, -s2, s2),
        "wo": jax.random.uniform(ks[4], (proj_dim, proj_dim), jnp.float32, -s2, s2),
        "bo": jax.random.uniform(ks[5], (1, proj_dim), jnp.float32, -s2, s2),
        # post LayerNorm(proj_dim)
        "ln2_g": jnp.ones((1, proj_dim), jnp.float32),
        "ln2_b": jnp.zeros((1, proj_dim), jnp.float32),
    }


if __name__ == "__main__":
    # Small shapes consistent with the module (input_dim -> proj_dim, 2-D input).
    # B=20 exercises the partial-last-block masking path; tb=8 forces a
    # multi-step grid on any generation.
    B, INPUT_DIM, PROJ_DIM = 20, 256, 128

    key = jax.random.PRNGKey(0)
    kx, kp = jax.random.split(key)
    x = jax.random.normal(kx, (B, INPUT_DIM), jnp.float32)
    params = make_params(kp, INPUT_DIM, PROJ_DIM)

    out = jax.block_until_ready(feature_processor(x, params))              # default tiling
    out_tiled = jax.block_until_ready(feature_processor(x, params, tb=8))  # 3-step grid

    assert out.shape == (B, PROJ_DIM)
    assert out_tiled.shape == (B, PROJ_DIM)

    ref_matched = feature_processor_matched_ref(x, params)  # same bf16/fusion rounding
    ref_f32 = feature_processor_ref(x, params)              # pure-f32 module reference

    # Tight check against a reference with identical bf16 casts + Wv@Wo fusion.
    assert jnp.allclose(out, ref_matched, atol=2e-3, rtol=2e-3), "mismatch vs matched ref"
    assert jnp.allclose(out_tiled, ref_matched, atol=2e-3, rtol=2e-3), "tiled mismatch"
    # Loose check against the pure-f32 reference (bf16 MXU operands change rounding).
    assert jnp.allclose(out, ref_f32, atol=5e-2, rtol=5e-2), "mismatch vs f32 ref"

    print("KERNEL_OK")
</pallas_src>

<mosaic_0001>
module attributes {stable_mosaic.version = 11 : i64} {
  func.func @feature_processor_kernel(%arg0: i32, %arg1: memref<16x256xf32, #tpu.memory_space<vmem>>, %arg2: memref<256x128xbf16, #tpu.memory_space<vmem>>, %arg3: memref<128x128xbf16, #tpu.memory_space<vmem>>, %arg4: memref<8x128xf32, #tpu.memory_space<vmem>>, %arg5: memref<16x128xf32, #tpu.memory_space<vmem>>) attributes {dimension_semantics = [#tpu.dimension_semantics<parallel>], iteration_bounds = array<i64: 2>, scalar_prefetch = 0 : i64, scratch_operands = 0 : i64, tpu.core_type = #tpu.core_type<tc>, window_params = [{transform_indices = @transform_0, window_bounds = array<i64: 16, 256>}, {pipeline_mode = #tpu.pipeline_mode<synchronous>, transform_indices = @transform_1, window_bounds = array<i64: 256, 128>}, {pipeline_mode = #tpu.pipeline_mode<synchronous>, transform_indices = @transform_2, window_bounds = array<i64: 128, 128>}, {pipeline_mode = #tpu.pipeline_mode<synchronous>, transform_indices = @transform_3, window_bounds = array<i64: 8, 128>}, {transform_indices = @transform_4, window_bounds = array<i64: 16, 128>}]} {
    %c0 = arith.constant 0 : index
    %c0_0 = arith.constant 0 : index
    %0 = vector.load %arg4[%c0, %c0_0] : memref<8x128xf32, #tpu.memory_space<vmem>>, vector<8x128xf32>
    %1 = vector.extract_strided_slice %0 {offsets = [0, 0], sizes = [1, 128], strides = [1, 1]} : vector<8x128xf32> to vector<1x128xf32>
    %2 = vector.extract_strided_slice %0 {offsets = [1, 0], sizes = [1, 128], strides = [1, 1]} : vector<8x128xf32> to vector<1x128xf32>
    %3 = vector.extract_strided_slice %0 {offsets = [2, 0], sizes = [1, 128], strides = [1, 1]} : vector<8x128xf32> to vector<1x128xf32>
    %4 = vector.extract_strided_slice %0 {offsets = [3, 0], sizes = [1, 128], strides = [1, 1]} : vector<8x128xf32> to vector<1x128xf32>
    %5 = vector.extract_strided_slice %0 {offsets = [4, 0], sizes = [1, 128], strides = [1, 1]} : vector<8x128xf32> to vector<1x128xf32>
    %6 = vector.extract_strided_slice %0 {offsets = [5, 0], sizes = [1, 128], strides = [1, 1]} : vector<8x128xf32> to vector<1x128xf32>
    %c0_1 = arith.constant 0 : index
    %c0_2 = arith.constant 0 : index
    %7 = vector.load %arg1[%c0_1, %c0_2] : memref<16x256xf32, #tpu.memory_space<vmem>>, vector<16x256xf32>
    %8 = arith.truncf %7 : vector<16x256xf32> to vector<16x256xbf16>
    %c0_3 = arith.constant 0 : index
    %c0_4 = arith.constant 0 : index
    %9 = vector.load %arg2[%c0_3, %c0_4] : memref<256x128xbf16, #tpu.memory_space<vmem>>, vector<256x128xbf16>
    %cst = arith.constant dense<0.000000e+00> : vector<16x128xf32>
    %10 = tpu.matmul %8, %9, %cst {dimension_numbers = #tpu.dot_dimension_numbers<[1], [0], [0], [1], [0, 0, 1, 1], [], []>} : vector<16x256xbf16>, vector<256x128xbf16>, vector<16x128xf32> -> vector<16x128xf32>
    %11 = vector.broadcast %1 : vector<1x128xf32> to vector<16x128xf32>
    %12 = arith.addf %10, %11 : vector<16x128xf32>
    %cst_5 = arith.constant dense<0.000000e+00> : vector<16xf32>
    %13 = vector.multi_reduction <add>, %12, %cst_5 [1] : vector<16x128xf32> to vector<16xf32>
    %14 = vector.shape_cast %13 : vector<16xf32> to vector<16x1xf32>
    %cst_6 = arith.constant 1.280000e+02 : f32
    %15 = vector.broadcast %cst_6 : f32 to vector<16x1xf32>
    %16 = arith.divf %14, %15 : vector<16x1xf32>
    %17 = vector.broadcast %16 : vector<16x1xf32> to vector<16x128xf32>
    %18 = arith.subf %12, %17 : vector<16x128xf32>
    %19 = arith.mulf %18, %18 : vector<16x128xf32>
    %cst_7 = arith.constant dense<0.000000e+00> : vector<16xf32>
    %20 = vector.multi_reduction <add>, %19, %cst_7 [1] : vector<16x128xf32> to vector<16xf32>
    %21 = vector.shape_cast %20 : vector<16xf32> to vector<16x1xf32>
    %cst_8 = arith.constant 1.280000e+02 : f32
    %22 = vector.broadcast %cst_8 : f32 to vector<16x1xf32>
    %23 = arith.divf %21, %22 : vector<16x1xf32>
    %cst_9 = arith.constant 9.99999974E-6 : f32
    %24 = vector.broadcast %cst_9 : f32 to vector<16x1xf32>
    %25 = arith.addf %23, %24 : vector<16x1xf32>
    %26 = math.rsqrt %25 : vector<16x1xf32>
    %27 = vector.broadcast %26 : vector<16x1xf32> to vector<16x128xf32>
    %28 = arith.mulf %18, %27 : vector<16x128xf32>
    %29 = vector.broadcast %2 : vector<1x128xf32> to vector<16x128xf32>
    %30 = arith.mulf %28, %29 : vector<16x128xf32>
    %31 = vector.broadcast %3 : vector<1x128xf32> to vector<16x128xf32>
    %32 = arith.addf %30, %31 : vector<16x128xf32>
    %cst_10 = arith.constant 5.000000e-01 : f32
    %33 = vector.broadcast %cst_10 : f32 to vector<16x128xf32>
    %34 = arith.mulf %33, %32 : vector<16x128xf32>
    %cst_11 = arith.constant 0.707106769 : f32
    %35 = vector.broadcast %cst_11 : f32 to vector<16x128xf32>
    %36 = arith.mulf %32, %35 : vector<16x128xf32>
    %37 = math.erf %36 : vector<16x128xf32>
    %cst_12 = arith.constant 1.000000e+00 : f32
    %38 = vector.broadcast %cst_12 : f32 to vector<16x128xf32>
    %39 = arith.addf %38, %37 : vector<16x128xf32>
    %40 = arith.mulf %34, %39 : vector<16x128xf32>
    %41 = arith.truncf %40 : vector<16x128xf32> to vector<16x128xbf16>
    %c0_13 = arith.constant 0 : index
    %c0_14 = arith.constant 0 : index
    %42 = vector.load %arg3[%c0_13, %c0_14] : memref<128x128xbf16, #tpu.memory_space<vmem>>, vector<128x128xbf16>
    %cst_15 = arith.constant dense<0.000000e+00> : vector<16x128xf32>
    %43 = tpu.matmul %41, %42, %cst_15 {dimension_numbers = #tpu.dot_dimension_numbers<[1], [0], [0], [1], [0, 0, 1, 1], [], []>} : vector<16x128xbf16>, vector<128x128xbf16>, vector<16x128xf32> -> vector<16x128xf32>
    %44 = vector.broadcast %4 : vector<1x128xf32> to vector<16x128xf32>
    %45 = arith.addf %43, %44 : vector<16x128xf32>
    %46 = arith.addf %40, %45 : vector<16x128xf32>
    %cst_16 = arith.constant dense<0.000000e+00> : vector<16xf32>
    %47 = vector.multi_reduction <add>, %46, %cst_16 [1] : vector<16x128xf32> to vector<16xf32>
    %48 = vector.shape_cast %47 : vector<16xf32> to vector<16x1xf32>
    %cst_17 = arith.constant 1.280000e+02 : f32
    %49 = vector.broadcast %cst_17 : f32 to vector<16x1xf32>
    %50 = arith.divf %48, %49 : vector<16x1xf32>
    %51 = vector.broadcast %50 : vector<16x1xf32> to vector<16x128xf32>
    %52 = arith.subf %46, %51 : vector<16x128xf32>
    %53 = arith.mulf %52, %52 : vector<16x128xf32>
    %cst_18 = arith.constant dense<0.000000e+00> : vector<16xf32>
    %54 = vector.multi_reduction <add>, %53, %cst_18 [1] : vector<16x128xf32> to vector<16xf32>
    %55 = vector.shape_cast %54 : vector<16xf32> to vector<16x1xf32>
    %cst_19 = arith.constant 1.280000e+02 : f32
    %56 = vector.broadcast %cst_19 : f32 to vector<16x1xf32>
    %57 = arith.divf %55, %56 : vector<16x1xf32>
    %cst_20 = arith.constant 9.99999974E-6 : f32
    %58 = vector.broadcast %cst_20 : f32 to vector<16x1xf32>
    %59 = arith.addf %57, %58 : vector<16x1xf32>
    %60 = math.rsqrt %59 : vector<16x1xf32>
    %61 = vector.broadcast %60 : vector<16x1xf32> to vector<16x128xf32>
    %62 = arith.mulf %52, %61 : vector<16x128xf32>
    %63 = vector.broadcast %5 : vector<1x128xf32> to vector<16x128xf32>
    %64 = arith.mulf %62, %63 : vector<16x128xf32>
    %65 = vector.broadcast %6 : vector<1x128xf32> to vector<16x128xf32>
    %66 = arith.addf %64, %65 : vector<16x128xf32>
    %c0_21 = arith.constant 0 : index
    %c0_22 = arith.constant 0 : index
    %67 = vector.load %arg5[%c0_21, %c0_22] : memref<16x128xf32, #tpu.memory_space<vmem>>, vector<16x128xf32>
    tpu.vector_store %arg5[%c0_21, %c0_22], %66 {strides = array<i32>} : memref<16x128xf32, #tpu.memory_space<vmem>>, vector<16x128xf32>,
    return
  }
  func.func @transform_0(%arg0: i32) -> (i32, i32) {
    %c0_i32 = arith.constant 0 : i32
    %c0_i32_0 = arith.constant 0 : i32
    return %arg0, %c0_i32 : i32, i32
  }
  func.func @transform_1(%arg0: i32) -> (i32, i32) {
    %c0_i32 = arith.constant 0 : i32
    %c0_i32_0 = arith.constant 0 : i32
    %c0_i32_1 = arith.constant 0 : i32
    return %c0_i32, %c0_i32_0 : i32, i32
  }
  func.func @transform_2(%arg0: i32) -> (i32, i32) {
    %c0_i32 = arith.constant 0 : i32
    %c0_i32_0 = arith.constant 0 : i32
    %c0_i32_1 = arith.constant 0 : i32
    return %c0_i32, %c0_i32_0 : i32, i32
  }
  func.func @transform_3(%arg0: i32) -> (i32, i32) {
    %c0_i32 = arith.constant 0 : i32
    %c0_i32_0 = arith.constant 0 : i32
    %c0_i32_1 = arith.constant 0 : i32
    return %c0_i32, %c0_i32_0 : i32, i32
  }
  func.func @transform_4(%arg0: i32) -> (i32, i32) {
    %c0_i32 = arith.constant 0 : i32
    %c0_i32_0 = arith.constant 0 : i32
    return %arg0, %c0_i32 : i32, i32
  }
}

</mosaic_0001>

<llo_original>
// kernel: tpu_custom_call.1
$region0: #{tpu_custom_call.1}
  #allocation0 [shape = 'u32[]', space=smem, size = 0x4, offset = 0x4, fixed_abs, tag = 'smem constant byte address 0x4 - core index']
  #allocation1 [shape = 'u32[144,128]{1,0:T(1,128)}', space=vmem, size = 0x12000, scoped, tag = 'internal scratch']
  %s0 = inlined_call_operand.hbm [shape: f32[20,256], index: 0, kind: input, shape index: {}]
  %s1 = inlined_call_operand.hbm [shape: bf16[256,128], index: 1, kind: input, shape index: {}]
  %s2 = inlined_call_operand.hbm [shape: bf16[128,128], index: 2, kind: input, shape index: {}]
  %s3 = inlined_call_operand.vmem [shape: f32[8,128], index: 3, kind: input, shape index: {}]
  %s4 = inlined_call_operand.hbm [shape: f32[20,128], index: 4, kind: output, shape index: {}]
  %s5 = sld [smem:[#allocation0]]
  $region61: #{tpu_custom_call.1} parent=0
    _
  %s7 = ssub.s32 1, %s5
  %s8 = scalar_select 0, %s7, %s5
  $region1: #{tpu_custom_call.1} parent=0
    #allocation2 [shape = 'u8[32768]{0}', space=vmem, size = 0x8000, scoped, tag = 'input window, operand 0']
    #allocation3 [shape = 's32[2]{0}', space=sflag, size = 0x8, scoped, tag = 'scoped memory for tpu_custom_call.1']
    #allocation4 [shape = 's32[2]{0}', space=sflag, size = 0x8, scoped, tag = 'scoped memory for tpu_custom_call.1']
    #allocation5 [shape = 'u8[65536]{0}', space=vmem, size = 0x10000, scoped, tag = 'input window, operand 1, single buffered']
    #allocation6 [shape = 's32[1]{0}', space=sflag, size = 0x4, scoped, tag = 'scoped memory for tpu_custom_call.1']
    #allocation7 [shape = 'u8[32768]{0}', space=vmem, size = 0x8000, scoped, tag = 'input window, operand 2, single buffered']
    #allocation8 [shape = 'u8[16384]{0}', space=vmem, size = 0x4000, scoped, tag = 'output window, operand 0']
    %9 = vsyncpa [#allocation3], 0
    %s10 = scalar_lea.sflag [#allocation3], 1
    %11 = vsyncpa %s10, 0
    %12 = vsyncpa [#allocation6], 0
    %13 = vsyncpa [#allocation4], 0
    %s14 = scalar_lea.sflag [#allocation4], 1
    %15 = vsyncpa %s14, 0
    loop: start=0, step=1, limit=4
    $region2: #{tpu_custom_call.1} parent=1 // loop_pre_header
      _
    $region3: #{tpu_custom_call.1} parent=1 // loop_header
      %s17 = sphi 0, %s21
      %p18 = scmp.ge.s32.totalorder %s17, 4
      %s27 = sphi 0, %s29
      %s30 = sphi 0, %s27
      %s31 = sphi 0, %s30
      %s47 = sphi 0, %s31
      %s51 = sphi 0, %s51
      %s53 = sphi 0, %s51
      %s54 = sphi 0, %s53
      %s68 = sphi 0, %s54
      %s72 = sphi 0, %s72
      %s74 = sphi 0, %s72
      %s75 = sphi 0, %s74
      %s89 = sphi 0, %s75
      %s93 = sphi 0, %s93
      %s95 = sphi 0, %s93
      %s96 = sphi 0, %s95
      %s110 = sphi 0, %s96
      %s116 = sphi 0, %s118
      %s119 = sphi 0, %s116
      %s120 = sphi 0, %s119
      %s136 = sphi 0, %s120
    $region4: #{tpu_custom_call.1} parent=1 // loop_header_branch
      %20 = sbr.rel (%p18) target = $region8
    $region5: #{tpu_custom_call.1} parent=1 // loop_body
      %s22 = ssub.s32 %s17, 1
      %s23 = ssub.s32 %s17, 2
      %s24 = sadd.s32 %s17, 1
      %s25 = ssub.s32 %s17, %s24
      %p26 = scmp.eq.s32.totalorder %s25, 0
      %s28 = sadd.s32 %s27, 1
      %s29 = scalar_select %p26, %s27, %s28
      %p32 = pneg %p26
      %p33 = scmp.eq.s32.totalorder %s17, 1
      %p34 = por %p32, %p33
      %p35 = scmp.ne.s32.totalorder %s27, %s30
      %p36 = scmp.eq.s32.totalorder %s17, 0
      %p37 = por %p35, %p36
      %p38 = scmp.ne.s32.totalorder %s27, %s30
      %p39 = scmp.eq.s32.totalorder %s22, 1
      %p40 = por %p38, %p39
      %p41 = scmp.ne.s32.totalorder %s30, %s31
      %p42 = scmp.eq.s32.totalorder %s22, 0
      %p43 = por %p41, %p42
      %p44 = scmp.ne.s32.totalorder %s30, %s31
      %p45 = scmp.eq.s32.totalorder %s23, 1
      %p46 = por %p44, %p45
      %p48 = scmp.ne.s32.totalorder %s31, %s47
      %p49 = scmp.eq.s32.totalorder %s23, 0
      %p50 = por %p48, %p49
      %s52 = sadd.s32 %s51, 1
      %p55 = scmp.eq.s32.totalorder %s17, 1
      %p56 = scmp.ne.s32.totalorder %s51, %s53
      %p57 = scmp.eq.s32.totalorder %s17, 0
      %p58 = por %p56, %p57
      %p59 = scmp.ne.s32.totalorder %s51, %s53
      %p60 = scmp.eq.s32.totalorder %s22, 1
      %p61 = por %p59, %p60
      %p62 = scmp.ne.s32.totalorder %s53, %s54
      %p63 = scmp.eq.s32.totalorder %s22, 0
      %p64 = por %p62, %p63
      %p65 = scmp.ne.s32.totalorder %s53, %s54
      %p66 = scmp.eq.s32.totalorder %s23, 1
      %p67 = por %p65, %p66
      %p69 = scmp.ne.s32.totalorder %s54, %s68
      %p70 = scmp.eq.s32.totalorder %s23, 0
      %p71 = por %p69, %p70
      %s73 = sadd.s32 %s72, 1
      %p76 = scmp.eq.s32.totalorder %s17, 1
      %p77 = scmp.ne.s32.totalorder %s72, %s74
      %p78 = scmp.eq.s32.totalorder %s17, 0
      %p79 = por %p77, %p78
      %p80 = scmp.ne.s32.totalorder %s72, %s74
      %p81 = scmp.eq.s32.totalorder %s22, 1
      %p82 = por %p80, %p81
      %p83 = scmp.ne.s32.totalorder %s74, %s75
      %p84 = scmp.eq.s32.totalorder %s22, 0
      %p85 = por %p83, %p84
      %p86 = scmp.ne.s32.totalorder %s74, %s75
      %p87 = scmp.eq.s32.totalorder %s23, 1
      %p88 = por %p86, %p87
      %p90 = scmp.ne.s32.totalorder %s75, %s89
      %p91 = scmp.eq.s32.totalorder %s23, 0
      %p92 = por %p90, %p91
      %s94 = sadd.s32 %s93, 1
      %p97 = scmp.eq.s32.totalorder %s17, 1
      %p98 = scmp.ne.s32.totalorder %s93, %s95
      %p99 = scmp.eq.s32.totalorder %s17, 0
      %p100 = por %p98, %p99
      %p101 = scmp.ne.s32.totalorder %s93, %s95
      %p102 = scmp.eq.s32.totalorder %s22, 1
      %p103 = por %p101, %p102
      %p104 = scmp.ne.s32.totalorder %s95, %s96
      %p105 = scmp.eq.s32.totalorder %s22, 0
      %p106 = por %p104, %p105
      %p107 = scmp.ne.s32.totalorder %s95, %s96
      %p108 = scmp.eq.s32.totalorder %s23, 1
      %p109 = por %p107, %p108
      %p111 = scmp.ne.s32.totalorder %s96, %s110
      %p112 = scmp.eq.s32.totalorder %s23, 0
      %p113 = por %p111, %p112
      %s114 = ssub.s32 %s17, %s24
      %p115 = scmp.eq.s32.totalorder %s114, 0
      %s117 = sadd.s32 %s116, 1
      %s118 = scalar_select %p115, %s116, %s117
      %p121 = pneg %p115
      %p122 = scmp.eq.s32.totalorder %s17, 1
      %p123 = por %p121, %p122
      %p124 = scmp.ne.s32.totalorder %s116, %s119
      %p125 = scmp.eq.s32.totalorder %s17, 0
      %p126 = por %p124, %p125
      %p127 = scmp.ne.s32.totalorder %s116, %s119
      %p128 = scmp.eq.s32.totalorder %s22, 1
      %p129 = por %p127, %p128
      %p130 = scmp.ne.s32.totalorder %s119, %s120
      %p131 = scmp.eq.s32.totalorder %s22, 0
      %p132 = por %p130, %p131
      %p133 = scmp.ne.s32.totalorder %s119, %s120
      %p134 = scmp.eq.s32.totalorder %s23, 1
      %p135 = por %p133, %p134
      %p137 = scmp.ne.s32.totalorder %s120, %s136
      %p138 = scmp.eq.s32.totalorder %s23, 0
      %p139 = por %p137, %p138
      %p140 = scmp.le.s32.totalorder 1, %s17
      %p141 = scmp.lt.s32.totalorder %s17, 3
      %p142 = pnand %p140, %p141
      %p143 = pneg %p142
      // Predicated region
      $region9: #{tpu_custom_call.1} parent=5 // pred_check
        _
      $region10: #{tpu_custom_call.1} parent=5 // pred_check_branch
        %145 = sbr.rel (%p142) target = $region12
      $region11: #{tpu_custom_call.1} parent=5 // pred_region
        %s146 = ssub.s32 %s17, 1
        // Predicated region
        $region13: #{tpu_custom_call.1} parent=11 // pred_check
          %p147 = pneg %p64
        $region14: #{tpu_custom_call.1} parent=11 // pred_check_branch
          %149 = sbr.rel (%p147) target = $region16
        $region15: #{tpu_custom_call.1} parent=11 // pred_region
          %s151 = ssub.s32 2048, 2048
          %152 = vsyncadd [#allocation6], %s151
          %s153 = sshll.u32 [#allocation5], 4
          %s154 = int_to_ptr.vmem [resolvable:$true] %s153
          %159 = dma.hbm_to_vmem [thread:$0]  %s1, 2048, %s154, [#allocation6], 64, 64, 4
        $region16: #{tpu_custom_call.1} parent=11 // pred_fallthru
          _
        // Predicated region
        $region17: #{tpu_custom_call.1} parent=11 // pred_check
          %p160 = pneg %p85
        $region18: #{tpu_custom_call.1} parent=11 // pred_check_branch
          %162 = sbr.rel (%p160) target = $region20
        $region19: #{tpu_custom_call.1} parent=11 // pred_region
          %s164 = ssub.s32 1024, 1024
          %165 = vsyncadd [#allocation6], %s164
          %s166 = sshll.u32 [#allocation7], 4
          %s167 = int_to_ptr.vmem [resolvable:$true] %s166
          %172 = dma.hbm_to_vmem [thread:$0]  %s2, 1024, %s167, [#allocation6], 64, 64, 4
        $region20: #{tpu_custom_call.1} parent=11 // pred_fallthru
          _
        // Predicated region
        $region21: #{tpu_custom_call.1} parent=11 // pred_check
          %p173 = pneg %p106
        $region22: #{tpu_custom_call.1} parent=11 // pred_check_branch
          %175 = sbr.rel (%p173) target = $region24
        $region23: #{tpu_custom_call.1} parent=11 // pred_region
          _
        $region24: #{tpu_custom_call.1} parent=11 // pred_fallthru
          _
      $region12: #{tpu_custom_call.1} parent=5 // pred_fallthru
        _
      %p176 = scmp.lt.s32.totalorder %s17, 2
      // Predicated region
      $region25: #{tpu_custom_call.1} parent=5 // pred_check
        %p177 = pneg %p176
      $region26: #{tpu_custom_call.1} parent=5 // pred_check_branch
        %179 = sbr.rel (%p177) target = $region28
      $region27: #{tpu_custom_call.1} parent=5 // pred_region
        // Predicated region
        $region29: #{tpu_custom_call.1} parent=27 // pred_check
          %p180 = pneg %p37
        $region30: #{tpu_custom_call.1} parent=27 // pred_check_branch
          %182 = sbr.rel (%p180) target = $region32
        $region31: #{tpu_custom_call.1} parent=27 // pred_region
          %s183 = sand.u32 %s27, 1
          %s184 = scalar_lea.sflag [#allocation3], %s183
          %s185 = sand.u32 %s27, 1
          %s186 = smul.addr %s185, 32
          %s187 = scalar_lea.vmem [#allocation2], %s186
          %s188 = smul.u32 2, %s17
          %s189 = ssub.s32 3, %s188
          %p190 = scmp.lt.s32.totalorder %s189, 2
          %s191 = scalar_select %p190, %s189, 2
          %s192 = smul.u32 128, %s191
          %s193 = smul.u32 %s192, 2
          %s195 = ssub.s32 512, %s193
          %196 = vsyncadd %s184, %s195
          %p197 = scmp.ne.s32.totalorder 0, %s193
          %s198 = smul.addr %s188, 2
          %s199 = smul.addr %s198, 128
          %s200 = scalar_lea.hbm %s0, %s199
          %s201 = smul.u32 16, %s191
          %s202 = sshll.u32 %s187, 4
          %s203 = int_to_ptr.vmem [resolvable:$true] %s202
          %s204 = sshll.u32 %s201, 4
          %208 = dma.hbm_to_vmem [thread:$0]  (%p197), %s200, %s204, %s203, %s184, 256, 256, 16
        $region32: #{tpu_custom_call.1} parent=27 // pred_fallthru
          _
      $region28: #{tpu_custom_call.1} parent=5 // pred_fallthru
        _
      %p209 = scmp.le.s32.totalorder 1, %s17
      %p210 = scmp.lt.s32.totalorder %s17, 3
      %p211 = pnand %p209, %p210
      %p212 = pneg %p211
      // Predicated region
      $region33: #{tpu_custom_call.1} parent=5 // pred_check
        _
      $region34: #{tpu_custom_call.1} parent=5 // pred_check_branch
        %214 = sbr.rel (%p211) target = $region36
      $region35: #{tpu_custom_call.1} parent=5 // pred_region
        %s215 = ssub.s32 %s17, 1
        %s216 = sand.u32 %s30, 1
        %s217 = scalar_lea.sflag [#allocation3], %s216
        %s218 = sand.u32 %s30, 1
        %s219 = smul.addr %s218, 32
        %s220 = scalar_lea.vmem [#allocation2], %s219
        // Predicated region
        $region37: #{tpu_custom_call.1} parent=35 // pred_check
          %p221 = pneg %p43
        $region38: #{tpu_custom_call.1} parent=35 // pred_check_branch
          %223 = sbr.rel (%p221) target = $region40
        $region39: #{tpu_custom_call.1} parent=35 // pred_region
          %224 = dma.done %s217, 512
        $region40: #{tpu_custom_call.1} parent=35 // pred_fallthru
          _
        // Predicated region
        $region41: #{tpu_custom_call.1} parent=35 // pred_check
          %p225 = pneg %p64
        $region42: #{tpu_custom_call.1} parent=35 // pred_check_branch
          %227 = sbr.rel (%p225) target = $region44
        $region43: #{tpu_custom_call.1} parent=35 // pred_region
          %228 = dma.done [#allocation6], 2048
        $region44: #{tpu_custom_call.1} parent=35 // pred_fallthru
          _
        // Predicated region
        $region45: #{tpu_custom_call.1} parent=35 // pred_check
          %p229 = pneg %p85
        $region46: #{tpu_custom_call.1} parent=35 // pred_check_branch
          %231 = sbr.rel (%p229) target = $region48
        $region47: #{tpu_custom_call.1} parent=35 // pred_region
          %232 = dma.done [#allocation6], 1024
        $region48: #{tpu_custom_call.1} parent=35 // pred_fallthru
          _
        %s233 = sand.u32 %s30, 1
        %s234 = scalar_lea.sflag [#allocation3], %s233
        %s235 = sand.u32 %s30, 1
        %s236 = smul.addr %s235, 32
        %s237 = scalar_lea.vmem [#allocation2], %s236
        %p238 = pneg %p43
        %p239 = pneg %p40
        %p240 = pneg %p64
        %p241 = pneg %p61
        %p242 = pneg %p85
        %p243 = pneg %p82
        %p244 = pneg %p106
        %p245 = pneg %p103
        %p246 = pneg %p132
        %p247 = pneg %p129
        %s248 = sand.u32 %s119, 1
        %s249 = scalar_lea.sflag [#allocation4], %s248
        %s250 = sand.u32 %s119, 1
        %s251 = smul.addr %s250, 16
        %s252 = scalar_lea.vmem [#allocation8], %s251
        %s253 = smul.u32 2, %s22
        %s254 = ssub.s32 3, %s253
        %p255 = scmp.lt.s32.totalorder %s254, 2
        %s256 = scalar_select %p255, %s254, 2
        %s257 = smul.u32 128, %s256
        %s258 = smul.u32 %s257, 2
        %s259 = smul.u32 2, %s22
        %s260 = ssub.s32 3, %s259
        %p261 = scmp.lt.s32.totalorder %s260, 2
        %s262 = scalar_select %p261, %s260, 2
        %s263 = smul.u32 128, %s262
        %v265 = vld [vmem:[%s3] sm:$0xff]
        %v266 = vld [vmem:[%s220] sm:$0xff]
        %v267 = vld [vmem:[%s220 + $0x8] sm:$0xff]
        %v268 = vld [vmem:[%s220 + $0x10] sm:$0xff]
        %v269 = vld [vmem:[%s220 + $0x18] sm:$0xff]
        %v270 = vpack.c.bf16 %v268, %v266
        %v271 = vpack.c.bf16 %v269, %v267
        %v272 = vld [vmem:[#allocation5] sm:$0xf]
        %v273 = vld [vmem:[#allocation5 + $0x4] sm:$0xf]
        %v274 = vld [vmem:[#allocation5 + $0x8] sm:$0xf]
        %v275 = vld [vmem:[#allocation5 + $0xc] sm:$0xf]
        %v276 = vld [vmem:[#allocation5 + $0x10] sm:$0xf]
        %v277 = vld [vmem:[#allocation5 + $0x14] sm:$0xf]
        %v278 = vld [vmem:[#allocation5 + $0x18] sm:$0xf]
        %v279 = vld [vmem:[#allocation5 + $0x1c] sm:$0xf]
        %v280 = vld [vmem:[#allocation5 + $0x20] sm:$0xf]
        %v281 = vld [vmem:[#allocation5 + $0x24] sm:$0xf]
        %v282 = vld [vmem:[#allocation5 + $0x28] sm:$0xf]
        %v283 = vld [vmem:[#allocation5 + $0x2c] sm:$0xf]
        %v284 = vld [vmem:[#allocation5 + $0x30] sm:$0xf]
        %v285 = vld [vmem:[#allocation5 + $0x34] sm:$0xf]
        %v286 = vld [vmem:[#allocation5 + $0x38] sm:$0xf]
        %v287 = vld [vmem:[#allocation5 + $0x3c] sm:$0xf]
        %v288 = vld [vmem:[#allocation5 + $0x40] sm:$0xf]
        %v289 = vld [vmem:[#allocation5 + $0x44] sm:$0xf]
        %v290 = vld [vmem:[#allocation5 + $0x48] sm:$0xf]
        %v291 = vld [vmem:[#allocation5 + $0x4c] sm:$0xf]
        %v292 = vld [vmem:[#allocation5 + $0x50] sm:$0xf]
        %v293 = vld [vmem:[#allocation5 + $0x54] sm:$0xf]
        %v294 = vld [vmem:[#allocation5 + $0x58] sm:$0xf]
        %v295 = vld [vmem:[#allocation5 + $0x5c] sm:$0xf]
        %v296 = vld [vmem:[#allocation5 + $0x60] sm:$0xf]
        %v297 = vld [vmem:[#allocation5 + $0x64] sm:$0xf]
        %v298 = vld [vmem:[#allocation5 + $0x68] sm:$0xf]
        %v299 = vld [vmem:[#allocation5 + $0x6c] sm:$0xf]
        %v300 = vld [vmem:[#allocation5 + $0x70] sm:$0xf]
        %v301 = vld [vmem:[#allocation5 + $0x74] sm:$0xf]
        %v302 = vld [vmem:[#allocation5 + $0x78] sm:$0xf]
        %v303 = vld [vmem:[#allocation5 + $0x7c] sm:$0xf]
        %v304 = vlaneseq
        %v305 = vshrl.u32 %v304, 7
        %v306 = vsub.s32 0, %v305
        %v307 = vrot.slane %v265, %v306
        %v340 = vunpack.c.l.b16 %v272
        %v341 = vunpack.c.l.b16 %v273
        %v342 = vunpack.c.l.b16 %v274
        %v343 = vunpack.c.l.b16 %v275
        %v344 = vunpack.c.l.b16 %v276
        %v345 = vunpack.c.l.b16 %v277
        %v346 = vunpack.c.l.b16 %v278
        %v347 = vunpack.c.l.b16 %v279
        %v348 = vunpack.c.l.b16 %v280
        %v349 = vunpack.c.l.b16 %v281
        %v350 = vunpack.c.l.b16 %v282
        %v351 = vunpack.c.l.b16 %v283
        %v352 = vunpack.c.l.b16 %v284
        %v353 = vunpack.c.l.b16 %v285
        %v354 = vunpack.c.l.b16 %v286
        %v355 = vunpack.c.l.b16 %v287
        %v356 = vunpack.c.l.b16 %v288
        %v357 = vunpack.c.l.b16 %v289
        %v358 = vunpack.c.l.b16 %v290
        %v359 = vunpack.c.l.b16 %v291
        %v360 = vunpack.c.l.b16 %v292
        %v361 = vunpack.c.l.b16 %v293
        %v362 = vunpack.c.l.b16 %v294
        %v363 = vunpack.c.l.b16 %v295
        %v364 = vunpack.c.l.b16 %v296
        %v365 = vunpack.c.l.b16 %v297
        %v366 = vunpack.c.l.b16 %v298
        %v367 = vunpack.c.l.b16 %v299
        %v368 = vunpack.c.l.b16 %v300
        %v369 = vunpack.c.l.b16 %v301
        %v370 = vunpack.c.l.b16 %v302
        %v371 = vunpack.c.l.b16 %v303
        %v372 = vpack.c.b16 %v341, %v340
        %v373 = vpack.c.b16 %v343, %v342
        %v374 = vpack.c.b16 %v345, %v344
        %v375 = vpack.c.b16 %v347, %v346
        %v376 = vpack.c.b16 %v349, %v348
        %v377 = vpack.c.b16 %v351, %v350
        %v378 = vpack.c.b16 %v353, %v352
        %v379 = vpack.c.b16 %v355, %v354
        %v380 = vpack.c.b16 %v357, %v356
        %v381 = vpack.c.b16 %v359, %v358
        %v382 = vpack.c.b16 %v361, %v360
        %v383 = vpack.c.b16 %v363, %v362
        %v384 = vpack.c.b16 %v365, %v364
        %v385 = vpack.c.b16 %v367, %v366
        %v386 = vpack.c.b16 %v369, %v368
        %v387 = vpack.c.b16 %v371, %v370
        %404 = vmatprep.subr.bf16.mxu0 0
        %405 = vmatpush1.bf16.msra.mxu0 %v372
        %406 = vmatprep.subr.bf16.mxu0 0
        %407 = vmatpush1.bf16.msra.mxu0 %v373
        %408 = vmatprep.subr.bf16.mxu0 0
        %409 = vmatpush1.bf16.msra.mxu0 %v374
        %410 = vmatprep.subr.bf16.mxu0 0
        %411 = vmatpush1.bf16.msra.mxu0 %v375
        %412 = vmatprep.subr.bf16.mxu0 0
        %413 = vmatpush1.bf16.msra.mxu0 %v376
        %414 = vmatprep.subr.bf16.mxu0 0
        %415 = vmatpush1.bf16.msra.mxu0 %v377
        %416 = vmatprep.subr.bf16.mxu0 0
        %417 = vmatpush1.bf16.msra.mxu0 %v378
        %418 = vmatprep.subr.bf16.mxu0 0
        %419 = vmatpush1.bf16.msra.mxu0 %v379
        %420 = vmatprep.subr.bf16.mxu0 0
        %421 = vmatpush1.bf16.msra.mxu0 %v380
        %422 = vmatprep.subr.bf16.mxu0 0
        %423 = vmatpush1.bf16.msra.mxu0 %v381
        %424 = vmatprep.subr.bf16.mxu0 0
        %425 = vmatpush1.bf16.msra.mxu0 %v382
        %426 = vmatprep.subr.bf16.mxu0 0
        %427 = vmatpush1.bf16.msra.mxu0 %v383
        %428 = vmatprep.subr.bf16.mxu0 0
        %429 = vmatpush1.bf16.msra.mxu0 %v384
        %430 = vmatprep.subr.bf16.mxu0 0
        %431 = vmatpush1.bf16.msra.mxu0 %v385
        %432 = vmatprep.subr.bf16.mxu0 0
        %433 = vmatpush1.bf16.msra.mxu0 %v386
        %434 = vmatprep.subr.bf16.mxu0 0
        %435 = vmatpush1.bf16.msra.mxu0 %v387
        %436 = vmatprep.mubr.bf16.mxu0 %v271
        %437 = vmatmul.mubr.bf16.gmra.mrb[0].mxu0 %v270
        %v438 = vpop.f32.mrb[0].mxu0
        %v439 = vadd.f32 %v307, %v438
        %v440 = vpop.f32.mrb[0].mxu0
        %v441 = vpop.f32.mrb[0].mxu0
        %v442 = vadd.f32 %v307, %v441
        %v443 = vpop.f32.mrb[0].mxu0
        %444 = vdwg.mxu0
        %445 = vadd.xlane.f32.xlu0 %v439
        %v446 = vpop.xlane.xlu0 %445
        %447 = vadd.xlane.f32.xlu0 %v442
        %v448 = vpop.xlane.xlu0 %447
        %v449 = vrcp.pop 128.0
        %v450 = vmul.f32 %v446, %v449
        %v451 = vmul.f32 %v448, %v449
        %v452 = vsub.f32 %v439, %v450
        %v453 = vsub.f32 %v442, %v451
        %v454 = vmul.f32 %v452, %v452
        %v455 = vmul.f32 %v453, %v453
        %456 = vadd.xlane.f32.xlu0 %v454
        %v457 = vpop.xlane.xlu0 %456
        %458 = vadd.xlane.f32.xlu0 %v455
        %v459 = vpop.xlane.xlu0 %458
        %v460 = vmul.f32 %v457, %v449
        %v461 = vmul.f32 %v459, %v449
        %v462 = vadd.f32 %v460, 1e-05
        %v463 = vadd.f32 %v461, 1e-05
        %v464 = vrsqrt.pop %v462
        %v465 = vrsqrt.pop %v463
        %v466 = vmul.f32 %v452, %v464
        %v467 = vmul.f32 %v453, %v465
        %v468 = vlaneseq
        %v469 = vshrl.u32 %v468, 7
        %v470 = vsub.s32 1, %v469
        %v471 = vrot.slane %v265, %v470
        %v472 = vmul.f32 %v466, %v471
        %v473 = vmul.f32 %v467, %v471
        %v474 = vlaneseq
        %v475 = vshrl.u32 %v474, 7
        %v476 = vsub.s32 2, %v475
        %v477 = vrot.slane %v265, %v476
        %v478 = vadd.f32 %v472, %v477
        %v479 = vadd.f32 %v473, %v477
        %v480 = vmul.f32 %v478, 0.5
        %v481 = vmul.f32 %v479, 0.5
        %v482 = vmul.f32 %v478, 0.70710677
        %v483 = vmul.f32 %v479, 0.70710677
        %v484 = verf.f32.pop %v482
        %v485 = verf.f32.pop %v483
        %v486 = vadd.f32 %v484, 1.0
        %v487 = vadd.f32 %v485, 1.0
        %v488 = vmul.f32 %v480, %v486
        %v489 = vmul.f32 %v481, %v487
        %v490 = vpack.c.bf16 %v489, %v488
        %v491 = vld [vmem:[#allocation7] sm:$0xf]
        %v492 = vld [vmem:[#allocation7 + $0x4] sm:$0xf]
        %v493 = vld [vmem:[#allocation7 + $0x8] sm:$0xf]
        %v494 = vld [vmem:[#allocation7 + $0xc] sm:$0xf]
        %v495 = vld [vmem:[#allocation7 + $0x10] sm:$0xf]
        %v496 = vld [vmem:[#allocation7 + $0x14] sm:$0xf]
        %v497 = vld [vmem:[#allocation7 + $0x18] sm:$0xf]
        %v498 = vld [vmem:[#allocation7 + $0x1c] sm:$0xf]
        %v499 = vld [vmem:[#allocation7 + $0x20] sm:$0xf]
        %v500 = vld [vmem:[#allocation7 + $0x24] sm:$0xf]
        %v501 = vld [vmem:[#allocation7 + $0x28] sm:$0xf]
        %v502 = vld [vmem:[#allocation7 + $0x2c] sm:$0xf]
        %v503 = vld [vmem:[#allocation7 + $0x30] sm:$0xf]
        %v504 = vld [vmem:[#allocation7 + $0x34] sm:$0xf]
        %v505 = vld [vmem:[#allocation7 + $0x38] sm:$0xf]
        %v506 = vld [vmem:[#allocation7 + $0x3c] sm:$0xf]
        %v507 = vlaneseq
        %v508 = vshrl.u32 %v507, 7
        %v509 = vsub.s32 3, %v508
        %v510 = vrot.slane %v265, %v509
        %v527 = vunpack.c.l.b16 %v491
        %v528 = vunpack.c.l.b16 %v492
        %v529 = vunpack.c.l.b16 %v493
        %v530 = vunpack.c.l.b16 %v494
        %v531 = vunpack.c.l.b16 %v495
        %v532 = vunpack.c.l.b16 %v496
        %v533 = vunpack.c.l.b16 %v497
        %v534 = vunpack.c.l.b16 %v498
        %v535 = vunpack.c.l.b16 %v499
        %v536 = vunpack.c.l.b16 %v500
        %v537 = vunpack.c.l.b16 %v501
        %v538 = vunpack.c.l.b16 %v502
        %v539 = vunpack.c.l.b16 %v503
        %v540 = vunpack.c.l.b16 %v504
        %v541 = vunpack.c.l.b16 %v505
        %v542 = vunpack.c.l.b16 %v506
        %v543 = vpack.c.b16 %v528, %v527
        %v544 = vpack.c.b16 %v530, %v529
        %v545 = vpack.c.b16 %v532, %v531
        %v546 = vpack.c.b16 %v534, %v533
        %v547 = vpack.c.b16 %v536, %v535
        %v548 = vpack.c.b16 %v538, %v537
        %v549 = vpack.c.b16 %v540, %v539
        %v550 = vpack.c.b16 %v542, %v541
        %559 = vmatprep.subr.bf16.mxu0 0
        %560 = vmatpush1.bf16.msra.mxu0 %v543
        %561 = vmatprep.subr.bf16.mxu0 0
        %562 = vmatpush1.bf16.msra.mxu0 %v544
        %563 = vmatprep.subr.bf16.mxu0 0
        %564 = vmatpush1.bf16.msra.mxu0 %v545
        %565 = vmatprep.subr.bf16.mxu0 0
        %566 = vmatpush1.bf16.msra.mxu0 %v546
        %567 = vmatprep.subr.bf16.mxu0 0
        %568 = vmatpush1.bf16.msra.mxu0 %v547
        %569 = vmatprep.subr.bf16.mxu0 0
        %570 = vmatpush1.bf16.msra.mxu0 %v548
        %571 = vmatprep.subr.bf16.mxu0 0
        %572 = vmatpush1.bf16.msra.mxu0 %v549
        %573 = vmatprep.subr.bf16.mxu0 0
        %574 = vmatpush1.bf16.msra.mxu0 %v550
        %575 = vmatprep.subr.bf16.mxu0 0
        %576 = vmatpush1.bf16.msra.mxu0 0
        %577 = vmatprep.subr.bf16.mxu0 0
        %578 = vmatpush1.bf16.msra.mxu0 0
        %579 = vmatprep.subr.bf16.mxu0 0
        %580 = vmatpush1.bf16.msra.mxu0 0
        %581 = vmatprep.subr.bf16.mxu0 0
        %582 = vmatpush1.bf16.msra.mxu0 0
        %583 = vmatprep.subr.bf16.mxu0 0
        %584 = vmatpush1.bf16.msra.mxu0 0
        %585 = vmatprep.subr.bf16.mxu0 0
        %586 = vmatpush1.bf16.msra.mxu0 0
        %587 = vmatprep.subr.bf16.mxu0 0
        %588 = vmatpush1.bf16.msra.mxu0 0
        %589 = vmatprep.subr.bf16.mxu0 0
        %590 = vmatpush1.bf16.msra.mxu0 0
        %591 = vmatprep.mubr.bf16.mxu0 0
        %592 = vmatmul.mubr.bf16.gmra.mrb[0].mxu0 %v490
        %v593 = vpop.f32.mrb[0].mxu0
        %v594 = vadd.f32 %v510, %v593
        %v595 = vpop.f32.mrb[0].mxu0
        %v596 = vpop.f32.mrb[0].mxu0
        %v597 = vadd.f32 %v510, %v596
        %v598 = vpop.f32.mrb[0].mxu0
        %599 = vdwg.mxu0
        %v600 = vadd.f32 %v488, %v594
        %v601 = vadd.f32 %v489, %v597
        %602 = vadd.xlane.f32.xlu0 %v600
        %v603 = vpop.xlane.xlu0 %602
        %604 = vadd.xlane.f32.xlu0 %v601
        %v605 = vpop.xlane.xlu0 %604
        %v606 = vmul.f32 %v603, %v449
        %v607 = vmul.f32 %v605, %v449
        %v608 = vsub.f32 %v600, %v606
        %v609 = vsub.f32 %v601, %v607
        %v610 = vmul.f32 %v608, %v608
        %v611 = vmul.f32 %v609, %v609
        %612 = vadd.xlane.f32.xlu0 %v610
        %v613 = vpop.xlane.xlu0 %612
        %614 = vadd.xlane.f32.xlu0 %v611
        %v615 = vpop.xlane.xlu0 %614
        %v616 = vmul.f32 %v613, %v449
        %v617 = vmul.f32 %v615, %v449
        %v618 = vadd.f32 %v616, 1e-05
        %v619 = vadd.f32 %v617, 1e-05
        %v620 = vrsqrt.pop %v618
        %v621 = vrsqrt.pop %v619
        %v622 = vmul.f32 %v608, %v620
        %v623 = vmul.f32 %v609, %v621
        %v624 = vlaneseq
        %v625 = vshrl.u32 %v624, 7
        %v626 = vsub.s32 4, %v625
        %v627 = vrot.slane %v265, %v626
        %v628 = vmul.f32 %v622, %v627
        %v629 = vmul.f32 %v623, %v627
        %v630 = vlaneseq
        %v631 = vshrl.u32 %v630, 7
        %v632 = vsub.s32 5, %v631
        %v633 = vrot.slane %v265, %v632
        %v634 = vadd.f32 %v628, %v633
        %v635 = vadd.f32 %v629, %v633
        %636 = vst [vmem:[%s252] sm:$0xff] %v634
        %637 = vst [vmem:[%s252 + $0x8] sm:$0xff] %v635
        %s638 = sand.u32 %s119, 1
        %s639 = scalar_lea.sflag [#allocation4], %s638
        %s640 = sand.u32 %s119, 1
        %s641 = smul.addr %s640, 16
        %s642 = scalar_lea.vmem [#allocation8], %s641
        // Predicated region
        $region49: #{tpu_custom_call.1} parent=35 // pred_check
          %p643 = pneg %p129
        $region50: #{tpu_custom_call.1} parent=35 // pred_check_branch
          %645 = sbr.rel (%p643) target = $region52
        $region51: #{tpu_custom_call.1} parent=35 // pred_region
          %s646 = smul.u32 2, %s22
          %s647 = ssub.s32 3, %s646
          %p648 = scmp.lt.s32.totalorder %s647, 2
          %s649 = scalar_select %p648, %s647, 2
          %s650 = smul.u32 128, %s649
          %s652 = ssub.s32 256, %s650
          %653 = vsyncadd %s639, %s652
          %p654 = scmp.ne.s32.totalorder 0, %s650
          %s655 = smul.addr %s646, 128
          %s656 = scalar_lea.hbm %s4, %s655
          %s657 = smul.u32 8, %s649
          %s658 = sshll.u32 %s642, 4
          %s659 = int_to_ptr.vmem [resolvable:$true] %s658
          %s660 = sshll.u32 %s657, 4
          %664 = dma.vmem_to_hbm [thread:$0]  (%p654), %s659, %s660, %s656, %s639, 128, 128, 8
        $region52: #{tpu_custom_call.1} parent=35 // pred_fallthru
          _
      $region36: #{tpu_custom_call.1} parent=5 // pred_fallthru
        _
      %p665 = scmp.le.s32.totalorder 2, %s17
      // Predicated region
      $region53: #{tpu_custom_call.1} parent=5 // pred_check
        %p666 = pneg %p665
      $region54: #{tpu_custom_call.1} parent=5 // pred_check_branch
        %668 = sbr.rel (%p666) target = $region56
      $region55: #{tpu_custom_call.1} parent=5 // pred_region
        %s669 = ssub.s32 %s17, 2
        // Predicated region
        $region57: #{tpu_custom_call.1} parent=55 // pred_check
          %p670 = pneg %p135
        $region58: #{tpu_custom_call.1} parent=55 // pred_check_branch
          %672 = sbr.rel (%p670) target = $region60
        $region59: #{tpu_custom_call.1} parent=55 // pred_region
          %s673 = sand.u32 %s120, 1
          %s674 = scalar_lea.sflag [#allocation4], %s673
          %s675 = sand.u32 %s120, 1
          %s676 = smul.addr %s675, 16
          %s677 = scalar_lea.vmem [#allocation8], %s676
          %678 = dma.done %s674, 256
        $region60: #{tpu_custom_call.1} parent=55 // pred_fallthru
          _
      $region56: #{tpu_custom_call.1} parent=5 // pred_fallthru
        _
    $region6: #{tpu_custom_call.1} parent=1 // loop_footer
      %s21 = sadd.s32 1, %s17
    $region7: #{tpu_custom_call.1} parent=1 // loop_footer_branch
      %16 = sbr.rel target = $region3
    $region8: #{tpu_custom_call.1} parent=1 // loop_exit
      _
    %679 = vsyncpa [#allocation3], 1
    %s680 = scalar_lea.sflag [#allocation3], 1
    %681 = vsyncpa %s680, 1
    %682 = vsyncpa [#allocation6], 1
    %683 = vsyncpa [#allocation4], 1
    %s684 = scalar_lea.sflag [#allocation4], 1
    %685 = vsyncpa %s684, 1

</llo_original>
